<compile_context>
chip_gen: v7x
topology: tpu7x:2x2x1
jax: 0.10.0
libtpu: 0.0.40
codegen_flags: <defaults>
</compile_context>

<pallas_src>
import functools

import jax
import jax.numpy as jnp
from jax.experimental import pallas as pl
from jax.experimental.pallas import tpu as pltpu


def _round_up(x, m):
    return ((x + m - 1) // m) * m


def _triplet_loss_kernel(a_ref, p_ref, n_ref, out_ref, *,
                         margin, true_b, block_b, needs_mask):
    a = a_ref[...].astype(jnp.float32)
    p = p_ref[...].astype(jnp.float32)
    n = n_ref[...].astype(jnp.float32)

    # dp - dn = sum_D((a-p)^2 - (a-n)^2) = sum_D((n - p) * (2a - p - n))
    # -> single fused cross-lane reduction, ~3 VALU ops/element.
    prod = (n - p) * (2.0 * a - (p + n))
    s = jnp.sum(prod, axis=1, keepdims=True)                 # (tb, 1)
    losses = jnp.maximum(s + jnp.float32(margin), 0.0)       # (tb, 1)

    # Only the final (partial) block can contain stale rows; the mask is
    # statically elided when B is a multiple of the row tile.
    if needs_mask:
        i = pl.program_id(0)
        row = i * block_b + jax.lax.broadcasted_iota(jnp.int32, losses.shape, 0)
        losses = jnp.where(row < true_b, losses, 0.0)        # select: stale NaN/Inf cannot leak

    partial = jnp.sum(losses, axis=0, keepdims=True)         # (1, 1) per-block partial sum

    # Store the partial into element [0,0] of a full (8,128) tile -> one
    # unmasked, lane-dense store per grid step; the wrapper just sums the
    # (tiny) partials array.
    r = jax.lax.broadcasted_iota(jnp.int32, (8, 128), 0)
    c = jax.lax.broadcasted_iota(jnp.int32, (8, 128), 1)
    out_ref[0] = jnp.where((r == 0) & (c == 0), partial, 0.0)


def triplet_loss(anchor, positive, negative, *, margin, size_average=True,
                 block_rows=None):
    """Pallas TPU implementation of TripletLoss.forward. Returns a scalar f32.

    Note: this kernel is HBM-read bound (~0.4 flop/byte).  For ~2x wall-clock,
    store/pass the three inputs as bf16 at the producer (the kernel upcasts to
    f32 internally); casting here would add its own HBM pass, so it is not done
    in this wrapper.
    """
    B, D = anchor.shape
    itemsize = jnp.dtype(anchor.dtype).itemsize

    # Row tile: target ~2 MiB per input block (amortizes per-step overhead,
    # ~85% of HBM roofline), rounded to the dtype's sublane packing.
    sub = max(8, 32 // itemsize)                  # f32: 8, bf16: 16
    Dp = _round_up(D, 128)                        # VMEM footprint per row (budgeting only)
    target_block_bytes = 2 * 1024 * 1024
    if block_rows is None:
        rows = max(sub, (target_block_bytes // (Dp * itemsize)) // sub * sub)
    else:
        rows = _round_up(max(int(block_rows), 1), sub)

    if rows >= B:
        tb = B                                    # single full-batch block (full-dim -> always legal)
        needs_mask = False
    else:
        tb = rows
        needs_mask = (B % tb) != 0

    num_blocks = -(-B // tb)                      # cdiv

    kernel = functools.partial(
        _triplet_loss_kernel,
        margin=float(margin),
        true_b=int(B),
        block_b=int(tb),
        needs_mask=bool(needs_mask),
    )

    in_spec = pl.BlockSpec((tb, D), lambda i: (i, 0))
    partials = pl.pallas_call(
        kernel,
        out_shape=jax.ShapeDtypeStruct((num_blocks, 8, 128), jnp.float32),
        grid=(num_blocks,),
        in_specs=[in_spec, in_spec, in_spec],
        out_specs=pl.BlockSpec((1, 8, 128), lambda i: (i, 0, 0)),
        compiler_params=pltpu.CompilerParams(
            dimension_semantics=("parallel",),    # no carried state -> both v7x TCs participate
            vmem_limit_bytes=48 * 1024 * 1024,    # headroom under v7x's 64 MiB physical VMEM
        ),
    )(anchor, positive, negative)

    total = jnp.sum(partials)                     # tiny host-side-of-kernel reduction
    if size_average:
        return total / jnp.float32(B)
    return total


def triplet_loss_ref(anchor, positive, negative, *, margin, size_average=True):
    """Pure-JAX reference mirroring the PyTorch forward exactly."""
    a = anchor.astype(jnp.float32)
    p = positive.astype(jnp.float32)
    n = negative.astype(jnp.float32)
    dp = jnp.sum((a - p) ** 2, axis=1)
    dn = jnp.sum((a - n) ** 2, axis=1)
    losses = jax.nn.relu(dp - dn + margin)
    return jnp.mean(losses) if size_average else jnp.sum(losses)


if __name__ == "__main__":
    # TripletLoss has no learned parameters; only the margin hyperparameter.
    margin = 1.0

    key = jax.random.PRNGKey(0)
    ka, kp, kn = jax.random.split(key, 3)

    # --- small lane-aligned case (matches the PyTorch (N, D) convention) ---
    B, D = 8, 128
    anchor = jax.random.normal(ka, (B, D), dtype=jnp.float32)
    positive = jax.random.normal(kp, (B, D), dtype=jnp.float32)
    negative = jax.random.normal(kn, (B, D), dtype=jnp.float32)

    out = jax.block_until_ready(
        triplet_loss(anchor, positive, negative, margin=margin, size_average=True)
    )
    ref = triplet_loss_ref(anchor, positive, negative, margin=margin, size_average=True)
    assert jnp.allclose(out, ref, rtol=1e-4, atol=1e-4), (out, ref)

    out_sum = jax.block_until_ready(
        triplet_loss(anchor, positive, negative, margin=margin, size_average=False)
    )
    ref_sum = triplet_loss_ref(
        anchor, positive, negative, margin=margin, size_average=False
    )
    assert jnp.allclose(out_sum, ref_sum, rtol=1e-4, atol=1e-4), (out_sum, ref_sum)

    # --- ragged, multi-block case: exercises unaligned D (full-D block, no pad),
    #     cdiv grid, final-partial-block row masking and per-block partials
    #     (block_rows=8 -> 5 grid steps over B=37). ---
    k2 = jax.random.split(key, 6)
    B2, D2 = 37, 200
    a2 = jax.random.normal(k2[3], (B2, D2), dtype=jnp.float32)
    p2 = jax.random.normal(k2[4], (B2, D2), dtype=jnp.float32)
    n2 = jax.random.normal(k2[5], (B2, D2), dtype=jnp.float32)

    out2 = jax.block_until_ready(
        triplet_loss(a2, p2, n2, margin=0.5, size_average=True, block_rows=8)
    )
    ref2 = triplet_loss_ref(a2, p2, n2, margin=0.5, size_average=True)
    assert jnp.allclose(out2, ref2, rtol=1e-4, atol=1e-4), (out2, ref2)

    out2_sum = jax.block_until_ready(
        triplet_loss(a2, p2, n2, margin=0.5, size_average=False, block_rows=8)
    )
    ref2_sum = triplet_loss_ref(a2, p2, n2, margin=0.5, size_average=False)
    assert jnp.allclose(out2_sum, ref2_sum, rtol=1e-4, atol=1e-4), (out2_sum, ref2_sum)

    # bf16 inputs also work (kernel upcasts internally); producers should pass
    # bf16 for ~2x wall-clock on this bandwidth-bound kernel.
    out_bf16 = jax.block_until_ready(
        triplet_loss(anchor.astype(jnp.bfloat16), positive.astype(jnp.bfloat16),
                     negative.astype(jnp.bfloat16), margin=margin)
    )
    ref_bf16 = triplet_loss_ref(anchor.astype(jnp.bfloat16), positive.astype(jnp.bfloat16),
                                negative.astype(jnp.bfloat16), margin=margin)
    assert jnp.allclose(out_bf16, ref_bf16, rtol=2e-2, atol=2e-2), (out_bf16, ref_bf16)

    print("KERNEL_OK")
</pallas_src>

<mosaic_0001>
module attributes {stable_mosaic.version = 11 : i64} {
  func.func @_triplet_loss_kernel(%arg0: i32, %arg1: memref<8x128xf32, #tpu.memory_space<vmem>>, %arg2: memref<8x128xf32, #tpu.memory_space<vmem>>, %arg3: memref<8x128xf32, #tpu.memory_space<vmem>>, %arg4: memref<1x8x128xf32, #tpu.memory_space<vmem>>) attributes {dimension_semantics = [#tpu.dimension_semantics<parallel>], iteration_bounds = array<i64: 1>, scalar_prefetch = 0 : i64, scratch_operands = 0 : i64, tpu.core_type = #tpu.core_type<tc>, window_params = [{transform_indices = @transform_0, window_bounds = array<i64: 8, 128>}, {transform_indices = @transform_1, window_bounds = array<i64: 8, 128>}, {transform_indices = @transform_2, window_bounds = array<i64: 8, 128>}, {transform_indices = @transform_3, window_bounds = array<i64: 1, 8, 128>}]} {
    %c0 = arith.constant 0 : index
    %c0_0 = arith.constant 0 : index
    %0 = vector.load %arg1[%c0, %c0_0] : memref<8x128xf32, #tpu.memory_space<vmem>>, vector<8x128xf32>
    %c0_1 = arith.constant 0 : index
    %c0_2 = arith.constant 0 : index
    %1 = vector.load %arg2[%c0_1, %c0_2] : memref<8x128xf32, #tpu.memory_space<vmem>>, vector<8x128xf32>
    %c0_3 = arith.constant 0 : index
    %c0_4 = arith.constant 0 : index
    %2 = vector.load %arg3[%c0_3, %c0_4] : memref<8x128xf32, #tpu.memory_space<vmem>>, vector<8x128xf32>
    %3 = arith.subf %2, %1 : vector<8x128xf32>
    %cst = arith.constant 2.000000e+00 : f32
    %4 = vector.broadcast %cst : f32 to vector<8x128xf32>
    %5 = arith.mulf %4, %0 : vector<8x128xf32>
    %6 = arith.addf %1, %2 : vector<8x128xf32>
    %7 = arith.subf %5, %6 : vector<8x128xf32>
    %8 = arith.mulf %3, %7 : vector<8x128xf32>
    %cst_5 = arith.constant dense<0.000000e+00> : vector<8xf32>
    %9 = vector.multi_reduction <add>, %8, %cst_5 [1] : vector<8x128xf32> to vector<8xf32>
    %10 = vector.shape_cast %9 : vector<8xf32> to vector<8x1xf32>
    %cst_6 = arith.constant 1.000000e+00 : f32
    %11 = vector.broadcast %cst_6 : f32 to vector<8x1xf32>
    %12 = arith.addf %10, %11 : vector<8x1xf32>
    %cst_7 = arith.constant 0.000000e+00 : f32
    %13 = vector.broadcast %cst_7 : f32 to vector<8x1xf32>
    %14 = arith.maximumf %12, %13 : vector<8x1xf32>
    %cst_8 = arith.constant dense<0.000000e+00> : vector<1xf32>
    %15 = vector.multi_reduction <add>, %14, %cst_8 [0] : vector<8x1xf32> to vector<1xf32>
    %16 = vector.shape_cast %15 : vector<1xf32> to vector<1x1xf32>
    %17 = tpu.iota {dimensions = array<i32: 0>} : vector<8x128xi32>
    %18 = tpu.iota {dimensions = array<i32: 1>} : vector<8x128xi32>
    %c0_i32 = arith.constant 0 : i32
    %19 = vector.broadcast %c0_i32 : i32 to vector<8x128xi32>
    %20 = arith.cmpi eq, %17, %19 : vector<8x128xi32>
    %c0_i32_9 = arith.constant 0 : i32
    %21 = vector.broadcast %c0_i32_9 : i32 to vector<8x128xi32>
    %22 = arith.cmpi eq, %18, %21 : vector<8x128xi32>
    %23 = arith.andi %20, %22 : vector<8x128xi1>
    %cst_10 = arith.constant 0.000000e+00 : f32
    %24 = vector.shape_cast %16 : vector<1x1xf32> to vector<1x1xf32>
    %25 = vector.broadcast %24 : vector<1x1xf32> to vector<8x128xf32>
    %26 = vector.broadcast %cst_10 : f32 to vector<8x128xf32>
    %27 = arith.select %23, %25, %26 : vector<8x128xi1>, vector<8x128xf32>
    %c0_11 = arith.constant 0 : index
    %c0_12 = arith.constant 0 : index
    %c0_13 = arith.constant 0 : index
    %28 = vector.load %arg4[%c0_11, %c0_12, %c0_13] : memref<1x8x128xf32, #tpu.memory_space<vmem>>, vector<1x8x128xf32>
    %29 = vector.shape_cast %28 : vector<1x8x128xf32> to vector<8x128xf32>
    %30 = vector.shape_cast %27 : vector<8x128xf32> to vector<1x8x128xf32>
    tpu.vector_store %arg4[%c0_11, %c0_12, %c0_13], %30 {strides = array<i32>} : memref<1x8x128xf32, #tpu.memory_space<vmem>>, vector<1x8x128xf32>,
    return
  }
  func.func @transform_0(%arg0: i32) -> (i32, i32) {
    %c0_i32 = arith.constant 0 : i32
    %c0_i32_0 = arith.constant 0 : i32
    return %arg0, %c0_i32 : i32, i32
  }
  func.func @transform_1(%arg0: i32) -> (i32, i32) {
    %c0_i32 = arith.constant 0 : i32
    %c0_i32_0 = arith.constant 0 : i32
    return %arg0, %c0_i32 : i32, i32
  }
  func.func @transform_2(%arg0: i32) -> (i32, i32) {
    %c0_i32 = arith.constant 0 : i32
    %c0_i32_0 = arith.constant 0 : i32
    return %arg0, %c0_i32 : i32, i32
  }
  func.func @transform_3(%arg0: i32) -> (i32, i32, i32) {
    %c0_i32 = arith.constant 0 : i32
    %c0_i32_0 = arith.constant 0 : i32
    %c0_i32_1 = arith.constant 0 : i32
    return %arg0, %c0_i32, %c0_i32_0 : i32, i32, i32
  }
}

</mosaic_0001>

<llo_original>
// kernel: tpu_custom_call.1
$region0: #{tpu_custom_call.1}
  #allocation0 [shape = 'u32[]', space=smem, size = 0x4, offset = 0x4, fixed_abs, tag = 'smem constant byte address 0x4 - core index']
  #allocation1 [shape = 'u32[144,128]{1,0:T(1,128)}', space=vmem, size = 0x12000, scoped, tag = 'internal scratch']
  %s0 = inlined_call_operand.hbm [shape: f32[8,128], index: 0, kind: input, shape index: {}]
  %s1 = inlined_call_operand.hbm [shape: f32[8,128], index: 1, kind: input, shape index: {}]
  %s2 = inlined_call_operand.hbm [shape: f32[8,128], index: 2, kind: input, shape index: {}]
  %s3 = inlined_call_operand.hbm [shape: f32[1,8,128], index: 3, kind: output, shape index: {}]
  %s4 = sld [smem:[#allocation0]]
  $region34: #{tpu_custom_call.1} parent=0
    _
  %s6 = ssub.s32 1, %s4
  %s7 = scalar_select 0, %s6, %s4
  $region1: #{tpu_custom_call.1} parent=0
    #allocation2 [shape = 'u8[4096]{0}', space=vmem, size = 0x1000, scoped, tag = 'input window, operand 0, single buffered']
    #allocation3 [shape = 's32[1]{0}', space=sflag, size = 0x4, scoped, tag = 'scoped memory for tpu_custom_call.1']
    #allocation4 [shape = 's32[1]{0}', space=sflag, size = 0x4, scoped, tag = 'scoped memory for tpu_custom_call.1']
    #allocation5 [shape = 'u8[4096]{0}', space=vmem, size = 0x1000, scoped, tag = 'input window, operand 1, single buffered']
    #allocation6 [shape = 's32[1]{0}', space=sflag, size = 0x4, scoped, tag = 'scoped memory for tpu_custom_call.1']
    #allocation7 [shape = 'u8[4096]{0}', space=vmem, size = 0x1000, scoped, tag = 'input window, operand 2, single buffered']
    #allocation8 [shape = 'u8[4096]{0}', space=vmem, size = 0x1000, scoped, tag = 'output window, operand 0, single buffered']
    %8 = vsyncpa [#allocation3], 0
    %9 = vsyncpa [#allocation6], 0
    %10 = vsyncpa [#allocation4], 0
    // Predicated region
    $region2: #{tpu_custom_call.1} parent=1 // pred_check
      _
    $region3: #{tpu_custom_call.1} parent=1 // pred_check_branch
      %12 = sbr.rel (0) target = $region5
    $region4: #{tpu_custom_call.1} parent=1 // pred_region
      %s14 = ssub.s32 128, 128
      %15 = vsyncadd [#allocation3], %s14
      %s17 = sshll.u32 [#allocation2], 4
      %s18 = int_to_ptr.vmem [resolvable:$true] %s17
      %20 = dma.hbm_to_vmem [thread:$0]  %s0, 128, %s18, [#allocation3]
    $region5: #{tpu_custom_call.1} parent=1 // pred_fallthru
      _
    // Predicated region
    $region6: #{tpu_custom_call.1} parent=1 // pred_check
      _
    $region7: #{tpu_custom_call.1} parent=1 // pred_check_branch
      %22 = sbr.rel (0) target = $region9
    $region8: #{tpu_custom_call.1} parent=1 // pred_region
      %s24 = ssub.s32 128, 128
      %25 = vsyncadd [#allocation6], %s24
      %s27 = sshll.u32 [#allocation5], 4
      %s28 = int_to_ptr.vmem [resolvable:$true] %s27
      %30 = dma.hbm_to_vmem [thread:$0]  %s1, 128, %s28, [#allocation6]
    $region9: #{tpu_custom_call.1} parent=1 // pred_fallthru
      _
    // Predicated region
    $region10: #{tpu_custom_call.1} parent=1 // pred_check
      _
    $region11: #{tpu_custom_call.1} parent=1 // pred_check_branch
      %32 = sbr.rel (0) target = $region13
    $region12: #{tpu_custom_call.1} parent=1 // pred_region
      %s34 = ssub.s32 128, 128
      %35 = vsyncadd [#allocation6], %s34
      %s37 = sshll.u32 [#allocation7], 4
      %s38 = int_to_ptr.vmem [resolvable:$true] %s37
      %40 = dma.hbm_to_vmem [thread:$0]  %s2, 128, %s38, [#allocation6]
    $region13: #{tpu_custom_call.1} parent=1 // pred_fallthru
      _
    // Predicated region
    $region14: #{tpu_custom_call.1} parent=1 // pred_check
      _
    $region15: #{tpu_custom_call.1} parent=1 // pred_check_branch
      %42 = sbr.rel (0) target = $region17
    $region16: #{tpu_custom_call.1} parent=1 // pred_region
      %43 = dma.done [#allocation3], 128
    $region17: #{tpu_custom_call.1} parent=1 // pred_fallthru
      _
    // Predicated region
    $region18: #{tpu_custom_call.1} parent=1 // pred_check
      _
    $region19: #{tpu_custom_call.1} parent=1 // pred_check_branch
      %45 = sbr.rel (0) target = $region21
    $region20: #{tpu_custom_call.1} parent=1 // pred_region
      %46 = dma.done [#allocation6], 128
    $region21: #{tpu_custom_call.1} parent=1 // pred_fallthru
      _
    // Predicated region
    $region22: #{tpu_custom_call.1} parent=1 // pred_check
      _
    $region23: #{tpu_custom_call.1} parent=1 // pred_check_branch
      %48 = sbr.rel (0) target = $region25
    $region24: #{tpu_custom_call.1} parent=1 // pred_region
      %49 = dma.done [#allocation6], 128
    $region25: #{tpu_custom_call.1} parent=1 // pred_fallthru
      _
    %v50 = vld [vmem:[#allocation2] sm:$0xff]
    %v51 = vld [vmem:[#allocation5] sm:$0xff]
    %v52 = vld [vmem:[#allocation7] sm:$0xff]
    %v53 = vsub.f32 %v52, %v51
    %v54 = vmul.f32 %v50, 2.0
    %v55 = vadd.f32 %v51, %v52
    %v56 = vsub.f32 %v54, %v55
    %v57 = vmul.f32 %v53, %v56
    %58 = vadd.xlane.f32.xlu0 %v57
    %v59 = vpop.xlane.xlu0 %58
    %v60 = vadd.f32 %v59, 1.0
    %v61 = vmax.f32 %v60, 0.0
    %v62 = vrot.slane %v61, 4
    %v63 = vadd.f32 %v61, %v62
    %v64 = vrot.slane %v63, 2
    %v65 = vadd.f32 %v63, %v64
    %v66 = vrot.slane %v65, 1
    %v67 = vadd.f32 %v65, %v66
    %v68 = vlaneseq
    %v69 = vshrl.u32 %v68, 7
    %v70 = vlaneseq
    %v71 = vand.u32 %v70, 127
    %vm72 = vcmp.eq.s32.totalorder %v69, 0
    %vm73 = vcmp.eq.s32.totalorder %v71, 0
    %vm74 = vmand %vm72, %vm73
    %v75 = vsel %vm74, %v67, 0.0
    %76 = vst [vmem:[#allocation8] sm:$0xff] %v75
    // Predicated region
    $region26: #{tpu_custom_call.1} parent=1 // pred_check
      _
    $region27: #{tpu_custom_call.1} parent=1 // pred_check_branch
      %78 = sbr.rel (0) target = $region29
    $region28: #{tpu_custom_call.1} parent=1 // pred_region
      %s80 = ssub.s32 128, 128
      %81 = vsyncadd [#allocation4], %s80
      %s83 = sshll.u32 [#allocation8], 4
      %s84 = int_to_ptr.vmem [resolvable:$true] %s83
      %86 = dma.vmem_to_hbm [thread:$0]  %s84, 128, %s3, [#allocation4]
    $region29: #{tpu_custom_call.1} parent=1 // pred_fallthru
      _
    // Predicated region
    $region30: #{tpu_custom_call.1} parent=1 // pred_check
      _
    $region31: #{tpu_custom_call.1} parent=1 // pred_check_branch
      %88 = sbr.rel (0) target = $region33
    $region32: #{tpu_custom_call.1} parent=1 // pred_region
      %89 = dma.done [#allocation4], 128
    $region33: #{tpu_custom_call.1} parent=1 // pred_fallthru
      _
    %90 = vsyncpa [#allocation3], 1
    %91 = vsyncpa [#allocation6], 1
    %92 = vsyncpa [#allocation4], 1

</llo_original>
